<compile_context>
chip_gen: v5e
topology: v5e:2x2
jax: 0.10.0
libtpu: 0.0.40
codegen_flags: <defaults>
</compile_context>

<pallas_src>
import jax
import jax.numpy as jnp
from jax.experimental import pallas as pl
from jax.experimental.pallas import tpu as pltpu

NUM_FLOWS = 4   # number of affine-coupling flows in the chain
DIM = 32        # latent dimension D (even, split into two halves of 16)
HIDDEN = 32     # conditioner MLP hidden width
HALF = DIM // 2


def _nf_forward_kernel(zt_ref, w1t_ref, b1_ref, wstt_ref, bst_ref, out_ref):
    """Apply NUM_FLOWS affine coupling flows to a feature-major batch tile.

    zt_ref  : [DIM, TB]         feature-major z tile (lanes = batch)
    w1t_ref : [K, HIDDEN, HALF] transposed first-layer weights
    b1_ref  : [K, HIDDEN, 1]    first-layer bias (column)
    wstt_ref: [K, DIM, HIDDEN]  transposed fused (s|t) projection weights
    bst_ref : [K, DIM, 1]       fused (s|t) bias (column)
    out_ref : [DIM, TB]
    """
    z_lo = zt_ref[:HALF, :].astype(jnp.float32)   # features 0:HALF
    z_hi = zt_ref[HALF:, :].astype(jnp.float32)   # features HALF:DIM

    for k in range(NUM_FLOWS):
        # Alternate which half is transformed (standard RealNVP masking).
        if k % 2 == 0:
            cond, trans = z_lo, z_hi
        else:
            cond, trans = z_hi, z_lo

        # Hoist bias loads once per flow.
        b1 = b1_ref[k]      # [HIDDEN, 1] -> lane-broadcast over batch
        bst = bst_ref[k]    # [DIM, 1]

        # Conditioner MLP (feature-major: W^T @ x).
        h = jnp.tanh(
            jnp.dot(w1t_ref[k], cond, preferred_element_type=jnp.float32)
            + b1)                                               # [HIDDEN, TB]
        st = (jnp.dot(wstt_ref[k], h, preferred_element_type=jnp.float32)
              + bst)                                            # [DIM, TB]
        s = jnp.tanh(st[:HALF, :])
        t = st[HALF:, :]

        # Affine coupling: zb' = zb * exp(s) + t
        new = trans * jnp.exp(s) + t
        if k % 2 == 0:
            z_hi = new
        else:
            z_lo = new

    # Lane-dense full-width stores; halves land on aligned sublane ranges.
    out_ref[:HALF, :] = z_lo.astype(out_ref.dtype)
    out_ref[HALF:, :] = z_hi.astype(out_ref.dtype)


def normalizing_flow_forward(z, params, *, tb=128):
    """Wrapper: NormalizingFlow.forward(z) -> x.

    z      : [B, D]  (batch-major, as in the PyTorch module)
    params : (w1, b1, ws, bs, wt, bt) with shapes
             w1 [K, HALF, HIDDEN], b1 [K, 1, HIDDEN],
             ws [K, HIDDEN, HALF], bs [K, 1, HALF],
             wt [K, HIDDEN, HALF], bt [K, 1, HALF]
    """
    w1, b1, ws, bs, wt, bt = params
    B, D = z.shape
    assert D == DIM
    assert B % tb == 0, "batch must be a multiple of the batch tile"

    # Host-side layout plumbing (feature-major z, transposed weights,
    # fused s/t projection).
    zt = z.T                                         # [D, B]
    w1t = jnp.transpose(w1, (0, 2, 1))               # [K, HIDDEN, HALF]
    b1c = jnp.transpose(b1, (0, 2, 1))               # [K, HIDDEN, 1]
    wst = jnp.concatenate([ws, wt], axis=-1)         # [K, HIDDEN, 2*HALF]
    wstt = jnp.transpose(wst, (0, 2, 1))             # [K, DIM, HIDDEN]
    bst = jnp.concatenate([bs, bt], axis=-1)         # [K, 1, 2*HALF]
    bstc = jnp.transpose(bst, (0, 2, 1))             # [K, DIM, 1]

    def resident(arr):
        shape = arr.shape
        return pl.BlockSpec(shape, lambda i, _s=shape: (0,) * len(_s))

    out_t = pl.pallas_call(
        _nf_forward_kernel,
        out_shape=jax.ShapeDtypeStruct((D, B), z.dtype),
        grid_spec=pltpu.PrefetchScalarGridSpec(
            num_scalar_prefetch=0,
            grid=(B // tb,),
            in_specs=[
                pl.BlockSpec((D, tb), lambda i: (0, i)),   # z tile
                resident(w1t),
                resident(b1c),
                resident(wstt),
                resident(bstc),
            ],
            out_specs=pl.BlockSpec((D, tb), lambda i: (0, i)),
        ),
        compiler_params=pltpu.CompilerParams(
            dimension_semantics=("parallel",)),
    )(zt, w1t, b1c, wstt, bstc)

    return out_t.T


def _reference_forward(z, params):
    """Pure-JAX reference of the same flow chain (for sanity check)."""
    w1, b1, ws, bs, wt, bt = params
    z = z.astype(jnp.float32)
    for k in range(NUM_FLOWS):
        if k % 2 == 0:
            za, zb = z[:, :HALF], z[:, HALF:]
        else:
            za, zb = z[:, HALF:], z[:, :HALF]
        h = jnp.tanh(za @ w1[k] + b1[k])
        s = jnp.tanh(h @ ws[k] + bs[k])
        t = h @ wt[k] + bt[k]
        zb_new = zb * jnp.exp(s) + t
        if k % 2 == 0:
            z = jnp.concatenate([za, zb_new], axis=-1)
        else:
            z = jnp.concatenate([zb_new, za], axis=-1)
    return z


def _init_params(key):
    """Deterministic parameter init (synthetic, small scale)."""
    ks = jax.random.split(key, 6)
    w1 = 0.1 * jax.random.normal(ks[0], (NUM_FLOWS, HALF, HIDDEN), jnp.float32)
    b1 = 0.1 * jax.random.normal(ks[1], (NUM_FLOWS, 1, HIDDEN), jnp.float32)
    ws = 0.1 * jax.random.normal(ks[2], (NUM_FLOWS, HIDDEN, HALF), jnp.float32)
    bs = 0.1 * jax.random.normal(ks[3], (NUM_FLOWS, 1, HALF), jnp.float32)
    wt = 0.1 * jax.random.normal(ks[4], (NUM_FLOWS, HIDDEN, HALF), jnp.float32)
    bt = 0.1 * jax.random.normal(ks[5], (NUM_FLOWS, 1, HALF), jnp.float32)
    return (w1, b1, ws, bs, wt, bt)


if __name__ == "__main__":
    key = jax.random.PRNGKey(0)
    pkey, zkey = jax.random.split(key)
    params = _init_params(pkey)

    B = 256  # two batch tiles of 128 -> exercises the grid / pipelining
    z = jax.random.normal(zkey, (B, DIM), jnp.float32)

    x = normalizing_flow_forward(z, params, tb=128)
    x = jax.block_until_ready(x)

    x_ref = _reference_forward(z, params)
    assert x.shape == (B, DIM)
    assert jnp.allclose(x, x_ref, atol=1e-5, rtol=1e-5)

    # TODO(synk): inverse / log_prob / forward_kld / sample need the base
    # distribution q0 and the flow inverses; only the forward transform chain
    # is kernelized.
    print("KERNEL_OK")
</pallas_src>

<mosaic_0001>
module attributes {stable_mosaic.version = 11 : i64} {
  func.func @_nf_forward_kernel(%arg0: i32, %arg1: memref<32x128xf32, #tpu.memory_space<vmem>>, %arg2: memref<4x32x16xf32, #tpu.memory_space<vmem>>, %arg3: memref<4x32x1xf32, #tpu.memory_space<vmem>>, %arg4: memref<4x32x32xf32, #tpu.memory_space<vmem>>, %arg5: memref<4x32x1xf32, #tpu.memory_space<vmem>>, %arg6: memref<32x128xf32, #tpu.memory_space<vmem>>) attributes {dimension_semantics = [#tpu.dimension_semantics<parallel>], iteration_bounds = array<i64: 2>, scalar_prefetch = 0 : i64, scratch_operands = 0 : i64, tpu.core_type = #tpu.core_type<tc>, window_params = [{transform_indices = @transform_0, window_bounds = array<i64: 32, 128>}, {pipeline_mode = #tpu.pipeline_mode<synchronous>, transform_indices = @transform_1, window_bounds = array<i64: 4, 32, 16>}, {pipeline_mode = #tpu.pipeline_mode<synchronous>, transform_indices = @transform_2, window_bounds = array<i64: 4, 32, 1>}, {pipeline_mode = #tpu.pipeline_mode<synchronous>, transform_indices = @transform_3, window_bounds = array<i64: 4, 32, 32>}, {pipeline_mode = #tpu.pipeline_mode<synchronous>, transform_indices = @transform_4, window_bounds = array<i64: 4, 32, 1>}, {transform_indices = @transform_5, window_bounds = array<i64: 32, 128>}]} {
    %c0 = arith.constant 0 : index
    %c0_0 = arith.constant 0 : index
    %0 = vector.load %arg1[%c0, %c0_0] : memref<32x128xf32, #tpu.memory_space<vmem>>, vector<16x128xf32>
    %c16 = arith.constant 16 : index
    %c0_1 = arith.constant 0 : index
    %1 = vector.load %arg1[%c16, %c0_1] : memref<32x128xf32, #tpu.memory_space<vmem>>, vector<16x128xf32>
    %c0_2 = arith.constant 0 : index
    %c0_3 = arith.constant 0 : index
    %c0_4 = arith.constant 0 : index
    %2 = vector.load %arg3[%c0_2, %c0_3, %c0_4] : memref<4x32x1xf32, #tpu.memory_space<vmem>>, vector<1x32x1xf32>
    %3 = vector.shape_cast %2 : vector<1x32x1xf32> to vector<32x1xf32>
    %c0_5 = arith.constant 0 : index
    %c0_6 = arith.constant 0 : index
    %c0_7 = arith.constant 0 : index
    %4 = vector.load %arg5[%c0_5, %c0_6, %c0_7] : memref<4x32x1xf32, #tpu.memory_space<vmem>>, vector<1x32x1xf32>
    %5 = vector.shape_cast %4 : vector<1x32x1xf32> to vector<32x1xf32>
    %c0_8 = arith.constant 0 : index
    %c0_9 = arith.constant 0 : index
    %c0_10 = arith.constant 0 : index
    %6 = vector.load %arg2[%c0_8, %c0_9, %c0_10] : memref<4x32x16xf32, #tpu.memory_space<vmem>>, vector<1x32x16xf32>
    %7 = vector.shape_cast %6 : vector<1x32x16xf32> to vector<32x16xf32>
    %cst = arith.constant dense<0.000000e+00> : vector<32x128xf32>
    %8 = tpu.matmul %7, %0, %cst {dimension_numbers = #tpu.dot_dimension_numbers<[1], [0], [0], [1], [0, 0, 1, 1], [], []>} : vector<32x16xf32>, vector<16x128xf32>, vector<32x128xf32> -> vector<32x128xf32>
    %9 = vector.broadcast %3 : vector<32x1xf32> to vector<32x128xf32>
    %10 = arith.addf %8, %9 : vector<32x128xf32>
    %11 = math.tanh %10 : vector<32x128xf32>
    %c0_11 = arith.constant 0 : index
    %c0_12 = arith.constant 0 : index
    %c0_13 = arith.constant 0 : index
    %12 = vector.load %arg4[%c0_11, %c0_12, %c0_13] : memref<4x32x32xf32, #tpu.memory_space<vmem>>, vector<1x32x32xf32>
    %13 = vector.shape_cast %12 : vector<1x32x32xf32> to vector<32x32xf32>
    %cst_14 = arith.constant dense<0.000000e+00> : vector<32x128xf32>
    %14 = tpu.matmul %13, %11, %cst_14 {dimension_numbers = #tpu.dot_dimension_numbers<[1], [0], [0], [1], [0, 0, 1, 1], [], []>} : vector<32x32xf32>, vector<32x128xf32>, vector<32x128xf32> -> vector<32x128xf32>
    %15 = vector.broadcast %5 : vector<32x1xf32> to vector<32x128xf32>
    %16 = arith.addf %14, %15 : vector<32x128xf32>
    %17 = vector.extract_strided_slice %16 {offsets = [0, 0], sizes = [16, 128], strides = [1, 1]} : vector<32x128xf32> to vector<16x128xf32>
    %18 = math.tanh %17 : vector<16x128xf32>
    %19 = vector.extract_strided_slice %16 {offsets = [16, 0], sizes = [16, 128], strides = [1, 1]} : vector<32x128xf32> to vector<16x128xf32>
    %20 = math.exp %18 : vector<16x128xf32>
    %21 = arith.mulf %1, %20 : vector<16x128xf32>
    %22 = arith.addf %21, %19 : vector<16x128xf32>
    %c1 = arith.constant 1 : index
    %c0_15 = arith.constant 0 : index
    %c0_16 = arith.constant 0 : index
    %23 = vector.load %arg3[%c1, %c0_15, %c0_16] : memref<4x32x1xf32, #tpu.memory_space<vmem>>, vector<1x32x1xf32>
    %24 = vector.shape_cast %23 : vector<1x32x1xf32> to vector<32x1xf32>
    %c1_17 = arith.constant 1 : index
    %c0_18 = arith.constant 0 : index
    %c0_19 = arith.constant 0 : index
    %25 = vector.load %arg5[%c1_17, %c0_18, %c0_19] : memref<4x32x1xf32, #tpu.memory_space<vmem>>, vector<1x32x1xf32>
    %26 = vector.shape_cast %25 : vector<1x32x1xf32> to vector<32x1xf32>
    %c1_20 = arith.constant 1 : index
    %c0_21 = arith.constant 0 : index
    %c0_22 = arith.constant 0 : index
    %27 = vector.load %arg2[%c1_20, %c0_21, %c0_22] : memref<4x32x16xf32, #tpu.memory_space<vmem>>, vector<1x32x16xf32>
    %28 = vector.shape_cast %27 : vector<1x32x16xf32> to vector<32x16xf32>
    %cst_23 = arith.constant dense<0.000000e+00> : vector<32x128xf32>
    %29 = tpu.matmul %28, %22, %cst_23 {dimension_numbers = #tpu.dot_dimension_numbers<[1], [0], [0], [1], [0, 0, 1, 1], [], []>} : vector<32x16xf32>, vector<16x128xf32>, vector<32x128xf32> -> vector<32x128xf32>
    %30 = vector.broadcast %24 : vector<32x1xf32> to vector<32x128xf32>
    %31 = arith.addf %29, %30 : vector<32x128xf32>
    %32 = math.tanh %31 : vector<32x128xf32>
    %c1_24 = arith.constant 1 : index
    %c0_25 = arith.constant 0 : index
    %c0_26 = arith.constant 0 : index
    %33 = vector.load %arg4[%c1_24, %c0_25, %c0_26] : memref<4x32x32xf32, #tpu.memory_space<vmem>>, vector<1x32x32xf32>
    %34 = vector.shape_cast %33 : vector<1x32x32xf32> to vector<32x32xf32>
    %cst_27 = arith.constant dense<0.000000e+00> : vector<32x128xf32>
    %35 = tpu.matmul %34, %32, %cst_27 {dimension_numbers = #tpu.dot_dimension_numbers<[1], [0], [0], [1], [0, 0, 1, 1], [], []>} : vector<32x32xf32>, vector<32x128xf32>, vector<32x128xf32> -> vector<32x128xf32>
    %36 = vector.broadcast %26 : vector<32x1xf32> to vector<32x128xf32>
    %37 = arith.addf %35, %36 : vector<32x128xf32>
    %38 = vector.extract_strided_slice %37 {offsets = [0, 0], sizes = [16, 128], strides = [1, 1]} : vector<32x128xf32> to vector<16x128xf32>
    %39 = math.tanh %38 : vector<16x128xf32>
    %40 = vector.extract_strided_slice %37 {offsets = [16, 0], sizes = [16, 128], strides = [1, 1]} : vector<32x128xf32> to vector<16x128xf32>
    %41 = math.exp %39 : vector<16x128xf32>
    %42 = arith.mulf %0, %41 : vector<16x128xf32>
    %43 = arith.addf %42, %40 : vector<16x128xf32>
    %c2 = arith.constant 2 : index
    %c0_28 = arith.constant 0 : index
    %c0_29 = arith.constant 0 : index
    %44 = vector.load %arg3[%c2, %c0_28, %c0_29] : memref<4x32x1xf32, #tpu.memory_space<vmem>>, vector<1x32x1xf32>
    %45 = vector.shape_cast %44 : vector<1x32x1xf32> to vector<32x1xf32>
    %c2_30 = arith.constant 2 : index
    %c0_31 = arith.constant 0 : index
    %c0_32 = arith.constant 0 : index
    %46 = vector.load %arg5[%c2_30, %c0_31, %c0_32] : memref<4x32x1xf32, #tpu.memory_space<vmem>>, vector<1x32x1xf32>
    %47 = vector.shape_cast %46 : vector<1x32x1xf32> to vector<32x1xf32>
    %c2_33 = arith.constant 2 : index
    %c0_34 = arith.constant 0 : index
    %c0_35 = arith.constant 0 : index
    %48 = vector.load %arg2[%c2_33, %c0_34, %c0_35] : memref<4x32x16xf32, #tpu.memory_space<vmem>>, vector<1x32x16xf32>
    %49 = vector.shape_cast %48 : vector<1x32x16xf32> to vector<32x16xf32>
    %cst_36 = arith.constant dense<0.000000e+00> : vector<32x128xf32>
    %50 = tpu.matmul %49, %43, %cst_36 {dimension_numbers = #tpu.dot_dimension_numbers<[1], [0], [0], [1], [0, 0, 1, 1], [], []>} : vector<32x16xf32>, vector<16x128xf32>, vector<32x128xf32> -> vector<32x128xf32>
    %51 = vector.broadcast %45 : vector<32x1xf32> to vector<32x128xf32>
    %52 = arith.addf %50, %51 : vector<32x128xf32>
    %53 = math.tanh %52 : vector<32x128xf32>
    %c2_37 = arith.constant 2 : index
    %c0_38 = arith.constant 0 : index
    %c0_39 = arith.constant 0 : index
    %54 = vector.load %arg4[%c2_37, %c0_38, %c0_39] : memref<4x32x32xf32, #tpu.memory_space<vmem>>, vector<1x32x32xf32>
    %55 = vector.shape_cast %54 : vector<1x32x32xf32> to vector<32x32xf32>
    %cst_40 = arith.constant dense<0.000000e+00> : vector<32x128xf32>
    %56 = tpu.matmul %55, %53, %cst_40 {dimension_numbers = #tpu.dot_dimension_numbers<[1], [0], [0], [1], [0, 0, 1, 1], [], []>} : vector<32x32xf32>, vector<32x128xf32>, vector<32x128xf32> -> vector<32x128xf32>
    %57 = vector.broadcast %47 : vector<32x1xf32> to vector<32x128xf32>
    %58 = arith.addf %56, %57 : vector<32x128xf32>
    %59 = vector.extract_strided_slice %58 {offsets = [0, 0], sizes = [16, 128], strides = [1, 1]} : vector<32x128xf32> to vector<16x128xf32>
    %60 = math.tanh %59 : vector<16x128xf32>
    %61 = vector.extract_strided_slice %58 {offsets = [16, 0], sizes = [16, 128], strides = [1, 1]} : vector<32x128xf32> to vector<16x128xf32>
    %62 = math.exp %60 : vector<16x128xf32>
    %63 = arith.mulf %22, %62 : vector<16x128xf32>
    %64 = arith.addf %63, %61 : vector<16x128xf32>
    %c3 = arith.constant 3 : index
    %c0_41 = arith.constant 0 : index
    %c0_42 = arith.constant 0 : index
    %65 = vector.load %arg3[%c3, %c0_41, %c0_42] : memref<4x32x1xf32, #tpu.memory_space<vmem>>, vector<1x32x1xf32>
    %66 = vector.shape_cast %65 : vector<1x32x1xf32> to vector<32x1xf32>
    %c3_43 = arith.constant 3 : index
    %c0_44 = arith.constant 0 : index
    %c0_45 = arith.constant 0 : index
    %67 = vector.load %arg5[%c3_43, %c0_44, %c0_45] : memref<4x32x1xf32, #tpu.memory_space<vmem>>, vector<1x32x1xf32>
    %68 = vector.shape_cast %67 : vector<1x32x1xf32> to vector<32x1xf32>
    %c3_46 = arith.constant 3 : index
    %c0_47 = arith.constant 0 : index
    %c0_48 = arith.constant 0 : index
    %69 = vector.load %arg2[%c3_46, %c0_47, %c0_48] : memref<4x32x16xf32, #tpu.memory_space<vmem>>, vector<1x32x16xf32>
    %70 = vector.shape_cast %69 : vector<1x32x16xf32> to vector<32x16xf32>
    %cst_49 = arith.constant dense<0.000000e+00> : vector<32x128xf32>
    %71 = tpu.matmul %70, %64, %cst_49 {dimension_numbers = #tpu.dot_dimension_numbers<[1], [0], [0], [1], [0, 0, 1, 1], [], []>} : vector<32x16xf32>, vector<16x128xf32>, vector<32x128xf32> -> vector<32x128xf32>
    %72 = vector.broadcast %66 : vector<32x1xf32> to vector<32x128xf32>
    %73 = arith.addf %71, %72 : vector<32x128xf32>
    %74 = math.tanh %73 : vector<32x128xf32>
    %c3_50 = arith.constant 3 : index
    %c0_51 = arith.constant 0 : index
    %c0_52 = arith.constant 0 : index
    %75 = vector.load %arg4[%c3_50, %c0_51, %c0_52] : memref<4x32x32xf32, #tpu.memory_space<vmem>>, vector<1x32x32xf32>
    %76 = vector.shape_cast %75 : vector<1x32x32xf32> to vector<32x32xf32>
    %cst_53 = arith.constant dense<0.000000e+00> : vector<32x128xf32>
    %77 = tpu.matmul %76, %74, %cst_53 {dimension_numbers = #tpu.dot_dimension_numbers<[1], [0], [0], [1], [0, 0, 1, 1], [], []>} : vector<32x32xf32>, vector<32x128xf32>, vector<32x128xf32> -> vector<32x128xf32>
    %78 = vector.broadcast %68 : vector<32x1xf32> to vector<32x128xf32>
    %79 = arith.addf %77, %78 : vector<32x128xf32>
    %80 = vector.extract_strided_slice %79 {offsets = [0, 0], sizes = [16, 128], strides = [1, 1]} : vector<32x128xf32> to vector<16x128xf32>
    %81 = math.tanh %80 : vector<16x128xf32>
    %82 = vector.extract_strided_slice %79 {offsets = [16, 0], sizes = [16, 128], strides = [1, 1]} : vector<32x128xf32> to vector<16x128xf32>
    %83 = math.exp %81 : vector<16x128xf32>
    %84 = arith.mulf %43, %83 : vector<16x128xf32>
    %85 = arith.addf %84, %82 : vector<16x128xf32>
    %c0_54 = arith.constant 0 : index
    %c0_55 = arith.constant 0 : index
    %86 = vector.load %arg6[%c0_54, %c0_55] : memref<32x128xf32, #tpu.memory_space<vmem>>, vector<16x128xf32>
    tpu.vector_store %arg6[%c0_54, %c0_55], %85 {strides = array<i32>} : memref<32x128xf32, #tpu.memory_space<vmem>>, vector<16x128xf32>,
    %c16_56 = arith.constant 16 : index
    %c0_57 = arith.constant 0 : index
    %87 = vector.load %arg6[%c16_56, %c0_57] : memref<32x128xf32, #tpu.memory_space<vmem>>, vector<16x128xf32>
    tpu.vector_store %arg6[%c16_56, %c0_57], %64 {strides = array<i32>} : memref<32x128xf32, #tpu.memory_space<vmem>>, vector<16x128xf32>,
    return
  }
  func.func @transform_0(%arg0: i32) -> (i32, i32) {
    %c0_i32 = arith.constant 0 : i32
    %c0_i32_0 = arith.constant 0 : i32
    return %c0_i32, %arg0 : i32, i32
  }
  func.func @transform_1(%arg0: i32) -> (i32, i32, i32) {
    %c0_i32 = arith.constant 0 : i32
    %c0_i32_0 = arith.constant 0 : i32
    %c0_i32_1 = arith.constant 0 : i32
    %c0_i32_2 = arith.constant 0 : i32
    return %c0_i32, %c0_i32_0, %c0_i32_1 : i32, i32, i32
  }
  func.func @transform_2(%arg0: i32) -> (i32, i32, i32) {
    %c0_i32 = arith.constant 0 : i32
    %c0_i32_0 = arith.constant 0 : i32
    %c0_i32_1 = arith.constant 0 : i32
    %c0_i32_2 = arith.constant 0 : i32
    return %c0_i32, %c0_i32_0, %c0_i32_1 : i32, i32, i32
  }
  func.func @transform_3(%arg0: i32) -> (i32, i32, i32) {
    %c0_i32 = arith.constant 0 : i32
    %c0_i32_0 = arith.constant 0 : i32
    %c0_i32_1 = arith.constant 0 : i32
    %c0_i32_2 = arith.constant 0 : i32
    return %c0_i32, %c0_i32_0, %c0_i32_1 : i32, i32, i32
  }
  func.func @transform_4(%arg0: i32) -> (i32, i32, i32) {
    %c0_i32 = arith.constant 0 : i32
    %c0_i32_0 = arith.constant 0 : i32
    %c0_i32_1 = arith.constant 0 : i32
    %c0_i32_2 = arith.constant 0 : i32
    return %c0_i32, %c0_i32_0, %c0_i32_1 : i32, i32, i32
  }
  func.func @transform_5(%arg0: i32) -> (i32, i32) {
    %c0_i32 = arith.constant 0 : i32
    %c0_i32_0 = arith.constant 0 : i32
    return %c0_i32, %arg0 : i32, i32
  }
}

</mosaic_0001>

<llo_original>
// kernel: tpu_custom_call.1
$region0: #{tpu_custom_call.1}
  #allocation0 [shape = 'u32[]', space=smem, size = 0x4, offset = 0x4, fixed_abs, tag = 'smem constant byte address 0x4 - core index']
  #allocation1 [shape = 'u32[72,128]{1,0:T(1,128)}', space=vmem, size = 0x9000, scoped, tag = 'internal scratch']
  %s0 = inlined_call_operand.vmem [shape: f32[32,256], index: 0, kind: input, shape index: {}]
  %s1 = inlined_call_operand.vmem [shape: f32[4,32,16], index: 1, kind: input, shape index: {}]
  %s2 = inlined_call_operand.vmem [shape: f32[4,32,1], index: 2, kind: input, shape index: {}]
  %s3 = inlined_call_operand.vmem [shape: f32[4,32,32], index: 3, kind: input, shape index: {}]
  %s4 = inlined_call_operand.vmem [shape: f32[4,32,1], index: 4, kind: input, shape index: {}]
  %s5 = inlined_call_operand.hbm [shape: f32[32,256], index: 5, kind: output, shape index: {}]
  %s6 = sld [smem:[#allocation0]]
  $region91: #{tpu_custom_call.1} parent=0
    _
  %s8 = ssub.s32 1, %s6
  %s9 = scalar_select 0, %s8, %s6
  $region1: #{tpu_custom_call.1} parent=0
    #allocation2 [shape = 'u8[32768]{0}', space=vmem, size = 0x8000, scoped, tag = 'input window, operand 0']
    #allocation3 [shape = 'u8[32768]{0}', space=vmem, size = 0x8000, scoped, tag = 'output window, operand 0']
    #allocation4 [shape = 's32[2]{0}', space=sflag, size = 0x8, scoped, tag = 'scoped memory for tpu_custom_call.1']
    %10 = vsyncpa [#allocation4], 0
    %s11 = scalar_lea.sflag [#allocation4], 1
    %12 = vsyncpa %s11, 0
    loop: start=0, step=1, limit=4
    $region2: #{tpu_custom_call.1} parent=1 // loop_pre_header
      _
    $region3: #{tpu_custom_call.1} parent=1 // loop_header
      %s14 = sphi 0, %s18
      %p15 = scmp.ge.s32.totalorder %s14, 4
      %s24 = sphi 0, %s26
      %s27 = sphi 0, %s24
      %s28 = sphi 0, %s27
      %s44 = sphi 0, %s28
      %s48 = sphi 0, %s48
      %s50 = sphi 0, %s48
      %s51 = sphi 0, %s50
      %s65 = sphi 0, %s51
      %s69 = sphi 0, %s69
      %s71 = sphi 0, %s69
      %s72 = sphi 0, %s71
      %s86 = sphi 0, %s72
      %s90 = sphi 0, %s90
      %s92 = sphi 0, %s90
      %s93 = sphi 0, %s92
      %s107 = sphi 0, %s93
      %s111 = sphi 0, %s111
      %s113 = sphi 0, %s111
      %s114 = sphi 0, %s113
      %s128 = sphi 0, %s114
      %s134 = sphi 0, %s136
      %s137 = sphi 0, %s134
      %s138 = sphi 0, %s137
      %s154 = sphi 0, %s138
    $region4: #{tpu_custom_call.1} parent=1 // loop_header_branch
      %17 = sbr.rel (%p15) target = $region8
    $region5: #{tpu_custom_call.1} parent=1 // loop_body
      %s19 = ssub.s32 %s14, 1
      %s20 = ssub.s32 %s14, 2
      %s21 = sadd.s32 %s14, 1
      %s22 = ssub.s32 %s14, %s21
      %p23 = scmp.eq.s32.totalorder %s22, 0
      %s25 = sadd.s32 %s24, 1
      %s26 = scalar_select %p23, %s24, %s25
      %p29 = pneg %p23
      %p30 = scmp.eq.s32.totalorder %s14, 1
      %p31 = por %p29, %p30
      %p32 = scmp.ne.s32.totalorder %s24, %s27
      %p33 = scmp.eq.s32.totalorder %s14, 0
      %p34 = por %p32, %p33
      %p35 = scmp.ne.s32.totalorder %s24, %s27
      %p36 = scmp.eq.s32.totalorder %s19, 1
      %p37 = por %p35, %p36
      %p38 = scmp.ne.s32.totalorder %s27, %s28
      %p39 = scmp.eq.s32.totalorder %s19, 0
      %p40 = por %p38, %p39
      %p41 = scmp.ne.s32.totalorder %s27, %s28
      %p42 = scmp.eq.s32.totalorder %s20, 1
      %p43 = por %p41, %p42
      %p45 = scmp.ne.s32.totalorder %s28, %s44
      %p46 = scmp.eq.s32.totalorder %s20, 0
      %p47 = por %p45, %p46
      %s49 = sadd.s32 %s48, 1
      %p52 = scmp.eq.s32.totalorder %s14, 1
      %p53 = scmp.ne.s32.totalorder %s48, %s50
      %p54 = scmp.eq.s32.totalorder %s14, 0
      %p55 = por %p53, %p54
      %p56 = scmp.ne.s32.totalorder %s48, %s50
      %p57 = scmp.eq.s32.totalorder %s19, 1
      %p58 = por %p56, %p57
      %p59 = scmp.ne.s32.totalorder %s50, %s51
      %p60 = scmp.eq.s32.totalorder %s19, 0
      %p61 = por %p59, %p60
      %p62 = scmp.ne.s32.totalorder %s50, %s51
      %p63 = scmp.eq.s32.totalorder %s20, 1
      %p64 = por %p62, %p63
      %p66 = scmp.ne.s32.totalorder %s51, %s65
      %p67 = scmp.eq.s32.totalorder %s20, 0
      %p68 = por %p66, %p67
      %s70 = sadd.s32 %s69, 1
      %p73 = scmp.eq.s32.totalorder %s14, 1
      %p74 = scmp.ne.s32.totalorder %s69, %s71
      %p75 = scmp.eq.s32.totalorder %s14, 0
      %p76 = por %p74, %p75
      %p77 = scmp.ne.s32.totalorder %s69, %s71
      %p78 = scmp.eq.s32.totalorder %s19, 1
      %p79 = por %p77, %p78
      %p80 = scmp.ne.s32.totalorder %s71, %s72
      %p81 = scmp.eq.s32.totalorder %s19, 0
      %p82 = por %p80, %p81
      %p83 = scmp.ne.s32.totalorder %s71, %s72
      %p84 = scmp.eq.s32.totalorder %s20, 1
      %p85 = por %p83, %p84
      %p87 = scmp.ne.s32.totalorder %s72, %s86
      %p88 = scmp.eq.s32.totalorder %s20, 0
      %p89 = por %p87, %p88
      %s91 = sadd.s32 %s90, 1
      %p94 = scmp.eq.s32.totalorder %s14, 1
      %p95 = scmp.ne.s32.totalorder %s90, %s92
      %p96 = scmp.eq.s32.totalorder %s14, 0
      %p97 = por %p95, %p96
      %p98 = scmp.ne.s32.totalorder %s90, %s92
      %p99 = scmp.eq.s32.totalorder %s19, 1
      %p100 = por %p98, %p99
      %p101 = scmp.ne.s32.totalorder %s92, %s93
      %p102 = scmp.eq.s32.totalorder %s19, 0
      %p103 = por %p101, %p102
      %p104 = scmp.ne.s32.totalorder %s92, %s93
      %p105 = scmp.eq.s32.totalorder %s20, 1
      %p106 = por %p104, %p105
      %p108 = scmp.ne.s32.totalorder %s93, %s107
      %p109 = scmp.eq.s32.totalorder %s20, 0
      %p110 = por %p108, %p109
      %s112 = sadd.s32 %s111, 1
      %p115 = scmp.eq.s32.totalorder %s14, 1
      %p116 = scmp.ne.s32.totalorder %s111, %s113
      %p117 = scmp.eq.s32.totalorder %s14, 0
      %p118 = por %p116, %p117
      %p119 = scmp.ne.s32.totalorder %s111, %s113
      %p120 = scmp.eq.s32.totalorder %s19, 1
      %p121 = por %p119, %p120
      %p122 = scmp.ne.s32.totalorder %s113, %s114
      %p123 = scmp.eq.s32.totalorder %s19, 0
      %p124 = por %p122, %p123
      %p125 = scmp.ne.s32.totalorder %s113, %s114
      %p126 = scmp.eq.s32.totalorder %s20, 1
      %p127 = por %p125, %p126
      %p129 = scmp.ne.s32.totalorder %s114, %s128
      %p130 = scmp.eq.s32.totalorder %s20, 0
      %p131 = por %p129, %p130
      %s132 = ssub.s32 %s14, %s21
      %p133 = scmp.eq.s32.totalorder %s132, 0
      %s135 = sadd.s32 %s134, 1
      %s136 = scalar_select %p133, %s134, %s135
      %p139 = pneg %p133
      %p140 = scmp.eq.s32.totalorder %s14, 1
      %p141 = por %p139, %p140
      %p142 = scmp.ne.s32.totalorder %s134, %s137
      %p143 = scmp.eq.s32.totalorder %s14, 0
      %p144 = por %p142, %p143
      %p145 = scmp.ne.s32.totalorder %s134, %s137
      %p146 = scmp.eq.s32.totalorder %s19, 1
      %p147 = por %p145, %p146
      %p148 = scmp.ne.s32.totalorder %s137, %s138
      %p149 = scmp.eq.s32.totalorder %s19, 0
      %p150 = por %p148, %p149
      %p151 = scmp.ne.s32.totalorder %s137, %s138
      %p152 = scmp.eq.s32.totalorder %s20, 1
      %p153 = por %p151, %p152
      %p155 = scmp.ne.s32.totalorder %s138, %s154
      %p156 = scmp.eq.s32.totalorder %s20, 0
      %p157 = por %p155, %p156
      %p158 = scmp.le.s32.totalorder 1, %s14
      %p159 = scmp.lt.s32.totalorder %s14, 3
      %p160 = pnand %p158, %p159
      %p161 = pneg %p160
      // Predicated region
      $region9: #{tpu_custom_call.1} parent=5 // pred_check
        _
      $region10: #{tpu_custom_call.1} parent=5 // pred_check_branch
        %163 = sbr.rel (%p160) target = $region12
      $region11: #{tpu_custom_call.1} parent=5 // pred_region
        %s164 = ssub.s32 %s14, 1
        // Predicated region
        $region13: #{tpu_custom_call.1} parent=11 // pred_check
          %p165 = pneg %p61
        $region14: #{tpu_custom_call.1} parent=11 // pred_check_branch
          %167 = sbr.rel (%p165) target = $region16
        $region15: #{tpu_custom_call.1} parent=11 // pred_region
          _
        $region16: #{tpu_custom_call.1} parent=11 // pred_fallthru
          _
        // Predicated region
        $region17: #{tpu_custom_call.1} parent=11 // pred_check
          %p168 = pneg %p82
        $region18: #{tpu_custom_call.1} parent=11 // pred_check_branch
          %170 = sbr.rel (%p168) target = $region20
        $region19: #{tpu_custom_call.1} parent=11 // pred_region
          _
        $region20: #{tpu_custom_call.1} parent=11 // pred_fallthru
          _
        // Predicated region
        $region21: #{tpu_custom_call.1} parent=11 // pred_check
          %p171 = pneg %p103
        $region22: #{tpu_custom_call.1} parent=11 // pred_check_branch
          %173 = sbr.rel (%p171) target = $region24
        $region23: #{tpu_custom_call.1} parent=11 // pred_region
          _
        $region24: #{tpu_custom_call.1} parent=11 // pred_fallthru
          _
        // Predicated region
        $region25: #{tpu_custom_call.1} parent=11 // pred_check
          %p174 = pneg %p124
        $region26: #{tpu_custom_call.1} parent=11 // pred_check_branch
          %176 = sbr.rel (%p174) target = $region28
        $region27: #{tpu_custom_call.1} parent=11 // pred_region
          _
        $region28: #{tpu_custom_call.1} parent=11 // pred_fallthru
          _
      $region12: #{tpu_custom_call.1} parent=5 // pred_fallthru
        _
      %p177 = scmp.lt.s32.totalorder %s14, 2
      // Predicated region
      $region29: #{tpu_custom_call.1} parent=5 // pred_check
        %p178 = pneg %p177
      $region30: #{tpu_custom_call.1} parent=5 // pred_check_branch
        %180 = sbr.rel (%p178) target = $region32
      $region31: #{tpu_custom_call.1} parent=5 // pred_region
        // Predicated region
        $region33: #{tpu_custom_call.1} parent=31 // pred_check
          %p181 = pneg %p34
        $region34: #{tpu_custom_call.1} parent=31 // pred_check_branch
          %183 = sbr.rel (%p181) target = $region36
        $region35: #{tpu_custom_call.1} parent=31 // pred_region
          %s184 = sand.u32 %s24, 1
          %s185 = sand.u32 %s24, 1
          %s186 = smul.addr %s185, 32
          %s187 = scalar_lea.vmem [#allocation2], %s186
          %s188 = smul.addr %s14, 8
          %s189 = scalar_lea.vmem %s0, %s188
          // Predicated region
          $region37: #{tpu_custom_call.1} parent=35 // pred_check
            _
          $region38: #{tpu_custom_call.1} parent=35 // pred_check_branch
            %191 = sbr.rel (0) target = $region40
          $region39: #{tpu_custom_call.1} parent=35 // pred_region
            // Predicated region
            $region41: #{tpu_custom_call.1} parent=39 // pred_check
              _
            $region42: #{tpu_custom_call.1} parent=39 // pred_check_branch
              %193 = sbr.rel (0) target = $region44
            $region43: #{tpu_custom_call.1} parent=39 // pred_region
              // Predicated region
              $region56: #{tpu_custom_call.1} parent=43 // pred_check
                _
              $region57: #{tpu_custom_call.1} parent=43 // pred_check_branch
                %215 = sbr.rel (0) target = $region59
              $region58: #{tpu_custom_call.1} parent=43 // pred_region
                loop: start=0, step=1, limit=1
                $region60: #{tpu_custom_call.1} parent=58 // loop_pre_header
                  _
                $region61: #{tpu_custom_call.1} parent=58 // loop_header
                  %s217 = sphi 0, %s221
                  %p218 = scmp.ge.s32.totalorder %s217, 1
                  %s222 = sphi %s189, %s189
                  %s223 = sphi %s187, %s187
                $region62: #{tpu_custom_call.1} parent=58 // loop_header_branch
                  %220 = sbr.rel (%p218) target = $region66
                $region63: #{tpu_custom_call.1} parent=58 // loop_body
                  %v224 = vld [vmem:[%s222] sm:$0xff]
                  %225 = vst [vmem:[%s223] sm:$0xff] %v224
                  %v226 = vld [vmem:[%s222 + $0x10] sm:$0xff]
                  %227 = vst [vmem:[%s223 + $0x8] sm:$0xff] %v226
                  %v228 = vld [vmem:[%s222 + $0x20] sm:$0xff]
                  %229 = vst [vmem:[%s223 + $0x10] sm:$0xff] %v228
                  %v230 = vld [vmem:[%s222 + $0x30] sm:$0xff]
                  %231 = vst [vmem:[%s223 + $0x18] sm:$0xff] %v230
                $region64: #{tpu_custom_call.1} parent=58 // loop_footer
                  %s221 = sadd.s32 1, %s217
                $region65: #{tpu_custom_call.1} parent=58 // loop_footer_branch
                  %216 = sbr.rel target = $region61
                $region66: #{tpu_custom_call.1} parent=58 // loop_exit
                  _
              $region59: #{tpu_custom_call.1} parent=43 // pred_fallthru
                _
              // Predicated region
              $region67: #{tpu_custom_call.1} parent=43 // pred_check
                _
              $region68: #{tpu_custom_call.1} parent=43 // pred_check_branch
                %233 = sbr.rel target = $region70
              $region69: #{tpu_custom_call.1} parent=43 // pred_region
                _
              $region70: #{tpu_custom_call.1} parent=43 // pred_fallthru
                _
            $region44: #{tpu_custom_call.1} parent=39 // pred_fallthru
              _
            // Predicated region
            $region45: #{tpu_custom_call.1} parent=39 // pred_check
              _
            $region46: #{tpu_custom_call.1} parent=39 // pred_check_branch
              %195 = sbr.rel target = $region48
            $region47: #{tpu_custom_call.1} parent=39 // pred_region
              %s197 = ssub.s32 256, 1
              loop: start=0, step=1, limit=1
              $region49: #{tpu_custom_call.1} parent=47 // loop_pre_header
                _
              $region50: #{tpu_custom_call.1} parent=47 // loop_header
                %s199 = sphi 0, %s203
                %p200 = scmp.ge.s32.totalorder %s199, 1
                %s204 = sphi %s189, %s189
                %s205 = sphi %s187, %s187
              $region51: #{tpu_custom_call.1} parent=47 // loop_header_branch
                %202 = sbr.rel (%p200) target = $region55
              $region52: #{tpu_custom_call.1} parent=47 // loop_body
                %v206 = vld [vmem:[%s204] sm:%s197]
                %207 = vst [vmem:[%s205] sm:%s197] %v206
                %v208 = vld [vmem:[%s204 + $0x10] sm:%s197]
                %209 = vst [vmem:[%s205 + $0x8] sm:%s197] %v208
                %v210 = vld [vmem:[%s204 + $0x20] sm:%s197]
                %211 = vst [vmem:[%s205 + $0x10] sm:%s197] %v210
                %v212 = vld [vmem:[%s204 + $0x30] sm:%s197]
                %213 = vst [vmem:[%s205 + $0x18] sm:%s197] %v212
              $region53: #{tpu_custom_call.1} parent=47 // loop_footer
                %s203 = sadd.s32 1, %s199
              $region54: #{tpu_custom_call.1} parent=47 // loop_footer_branch
                %198 = sbr.rel target = $region50
              $region55: #{tpu_custom_call.1} parent=47 // loop_exit
                _
            $region48: #{tpu_custom_call.1} parent=39 // pred_fallthru
              _
          $region40: #{tpu_custom_call.1} parent=35 // pred_fallthru
            _
          %234 = vnop
        $region36: #{tpu_custom_call.1} parent=31 // pred_fallthru
          _
      $region32: #{tpu_custom_call.1} parent=5 // pred_fallthru
        _
      %p235 = scmp.le.s32.totalorder 1, %s14
      %p236 = scmp.lt.s32.totalorder %s14, 3
      %p237 = pnand %p235, %p236
      %p238 = pneg %p237
      // Predicated region
      $region71: #{tpu_custom_call.1} parent=5 // pred_check
        _
      $region72: #{tpu_custom_call.1} parent=5 // pred_check_branch
        %240 = sbr.rel (%p237) target = $region74
      $region73: #{tpu_custom_call.1} parent=5 // pred_region
        %s241 = ssub.s32 %s14, 1
        %s242 = sand.u32 %s27, 1
        %s243 = sand.u32 %s27, 1
        %s244 = smul.addr %s243, 32
        %s245 = scalar_lea.vmem [#allocation2], %s244
        // Predicated region
        $region75: #{tpu_custom_call.1} parent=73 // pred_check
          %p246 = pneg %p40
        $region76: #{tpu_custom_call.1} parent=73 // pred_check_branch
          %248 = sbr.rel (%p246) target = $region78
        $region77: #{tpu_custom_call.1} parent=73 // pred_region
          _
        $region78: #{tpu_custom_call.1} parent=73 // pred_fallthru
          _
        %s249 = sand.u32 %s27, 1
        %s250 = sand.u32 %s27, 1
        %s251 = smul.addr %s250, 32
        %s252 = scalar_lea.vmem [#allocation2], %s251
        %p253 = pneg %p40
        %p254 = pneg %p37
        %p255 = pneg %p61
        %p256 = pneg %p58
        %p257 = pneg %p82
        %p258 = pneg %p79
        %p259 = pneg %p103
        %p260 = pneg %p100
        %p261 = pneg %p124
        %p262 = pneg %p121
        %p263 = pneg %p150
        %p264 = pneg %p147
        %s265 = sand.u32 %s137, 1
        %s266 = scalar_lea.sflag [#allocation4], %s265
        %s267 = sand.u32 %s137, 1
        %s268 = smul.addr %s267, 32
        %s269 = scalar_lea.vmem [#allocation3], %s268
        %v270 = vld [vmem:[%s245] sm:$0xff]
        %v271 = vld [vmem:[%s245 + $0x8] sm:$0xff]
        %v272 = vld [vmem:[%s245 + $0x10] sm:$0xff]
        %v273 = vld [vmem:[%s245 + $0x18] sm:$0xff]
        %v274 = vld [vmem:[%s2] sm:$0xff]
        %v275 = vld [vmem:[%s2 + $0x8] sm:$0xff]
        %v276 = vld [vmem:[%s2 + $0x10] sm:$0xff]
        %v277 = vld [vmem:[%s2 + $0x18] sm:$0xff]
        %v278 = vld [vmem:[%s4] sm:$0xff]
        %v279 = vld [vmem:[%s4 + $0x8] sm:$0xff]
        %v280 = vld [vmem:[%s4 + $0x10] sm:$0xff]
        %v281 = vld [vmem:[%s4 + $0x18] sm:$0xff]
        %v282 = vld [vmem:[%s1] sm:$0xff]
        %v283 = vld [vmem:[%s1 + $0x8] sm:$0xff]
        %v284 = vld [vmem:[%s1 + $0x10] sm:$0xff]
        %v285 = vld [vmem:[%s1 + $0x18] sm:$0xff]
        %287 = vset.pattern.permute.xlu0 0
        %288 = vperm.xlu0 %287, %v274
        %v289 = vpop.permute.xlu0 %288
        %292 = vset.pattern.permute.xlu0 0
        %293 = vperm.xlu0 %292, %v275
        %v294 = vpop.permute.xlu0 %293
        %297 = vset.pattern.permute.xlu0 0
        %298 = vperm.xlu0 %297, %v276
        %v299 = vpop.permute.xlu0 %298
        %302 = vset.pattern.permute.xlu0 0
        %303 = vperm.xlu0 %302, %v277
        %v304 = vpop.permute.xlu0 %303
        %vm306 = vcmask 130048
        %v308 = vsel %vm306, %v282, 0
        %v311 = vsel %vm306, %v283, 0
        %v314 = vsel %vm306, %v284, 0
        %v317 = vsel %vm306, %v285, 0
        %319 = vmatpush.msra.mxu0 0.0
        %320 = vmatpush.msra.mxu0 0.0
        %321 = vmatpush.msra.mxu0 0.0
        %322 = vmatpush.msra.mxu0 0.0
        %323 = vmatpush.msra.mxu0 0.0
        %324 = vmatpush.msra.mxu0 0.0
        %325 = vmatpush.msra.mxu0 0.0
        %326 = vmatpush.msra.mxu0 0.0
        %327 = vmatpush.msra.mxu0 0.0
        %328 = vmatpush.msra.mxu0 0.0
        %329 = vmatpush.msra.mxu0 0.0
        %330 = vmatpush.msra.mxu0 0.0
        %331 = vmatpush.msra.mxu0 0.0
        %332 = vmatpush.msra.mxu0 0.0
        %333 = vmatpush.msra.mxu0 %v271
        %334 = vmatpush.msra.mxu0 %v270
        %335 = vmatmul.f32.gmra.mxu0 %v308
        %v336 = vpop.f32.mrf.mxu0
        %v337 = vadd.f32 %v289, %v336
        %338 = vmatmul.f32.gmra.mxu0 %v311
        %v339 = vpop.f32.mrf.mxu0
        %v340 = vadd.f32 %v294, %v339
        %341 = vmatmul.f32.gmra.mxu0 %v314
        %v342 = vpop.f32.mrf.mxu0
        %v343 = vadd.f32 %v299, %v342
        %344 = vmatmul.f32.gmra.mxu0 %v317
        %v345 = vpop.f32.mrf.mxu0
        %v346 = vadd.f32 %v304, %v345
        %347 = vdwg.mxu0
        %v348 = vtanh.pop %v337
        %v349 = vtanh.pop %v340
        %v350 = vtanh.pop %v343
        %v351 = vtanh.pop %v346
        %v352 = vld [vmem:[%s3] sm:$0xff]
        %v353 = vld [vmem:[%s3 + $0x8] sm:$0xff]
        %v354 = vld [vmem:[%s3 + $0x10] sm:$0xff]
        %v355 = vld [vmem:[%s3 + $0x18] sm:$0xff]
        %357 = vset.pattern.permute.xlu0 0
        %358 = vperm.xlu0 %357, %v278
        %v359 = vpop.permute.xlu0 %358
        %362 = vset.pattern.permute.xlu0 0
        %363 = vperm.xlu0 %362, %v279
        %v364 = vpop.permute.xlu0 %363
        %367 = vset.pattern.permute.xlu0 0
        %368 = vperm.xlu0 %367, %v280
        %v369 = vpop.permute.xlu0 %368
        %372 = vset.pattern.permute.xlu0 0
        %373 = vperm.xlu0 %372, %v281
        %v374 = vpop.permute.xlu0 %373
        %vm376 = vcmask 261120
        %v378 = vsel %vm376, %v352, 0
        %v381 = vsel %vm376, %v353, 0
        %v384 = vsel %vm376, %v354, 0
        %v387 = vsel %vm376, %v355, 0
        %389 = vmatpush.msra.mxu0 0.0
        %390 = vmatpush.msra.mxu0 0.0
        %391 = vmatpush.msra.mxu0 0.0
        %392 = vmatpush.msra.mxu0 0.0
        %393 = vmatpush.msra.mxu0 0.0
        %394 = vmatpush.msra.mxu0 0.0
        %395 = vmatpush.msra.mxu0 0.0
        %396 = vmatpush.msra.mxu0 0.0
        %397 = vmatpush.msra.mxu0 0.0
        %398 = vmatpush.msra.mxu0 0.0
        %399 = vmatpush.msra.mxu0 0.0
        %400 = vmatpush.msra.mxu0 0.0
        %401 = vmatpush.msra.mxu0 %v351
        %402 = vmatpush.msra.mxu0 %v350
        %403 = vmatpush.msra.mxu0 %v349
        %404 = vmatpush.msra.mxu0 %v348
        %405 = vmatmul.f32.gmra.mxu0 %v378
        %v406 = vpop.f32.mrf.mxu0
        %v407 = vadd.f32 %v359, %v406
        %408 = vmatmul.f32.gmra.mxu0 %v381
        %v409 = vpop.f32.mrf.mxu0
        %v410 = vadd.f32 %v364, %v409
        %411 = vmatmul.f32.gmra.mxu0 %v384
        %v412 = vpop.f32.mrf.mxu0
        %v413 = vadd.f32 %v369, %v412
        %414 = vmatmul.f32.gmra.mxu0 %v387
        %v415 = vpop.f32.mrf.mxu0
        %v416 = vadd.f32 %v374, %v415
        %417 = vdwg.mxu0
        %v418 = vtanh.pop %v407
        %v419 = vtanh.pop %v410
        %v420 = vmul.f32 %v418, 1.442695
        %v421 = vpow.pop %v420
        %v422 = vmul.f32 %v419, 1.442695
        %v423 = vpow.pop %v422
        %v424 = vmul.f32 %v272, %v421
        %v425 = vmul.f32 %v273, %v423
        %v426 = vadd.f32 %v424, %v413
        %v427 = vadd.f32 %v425, %v416
        %s428 = scalar_lea.vmem %s2, 32
        %v429 = vld [vmem:[%s428] sm:$0xff]
        %v430 = vld [vmem:[%s428 + $0x8] sm:$0xff]
        %v431 = vld [vmem:[%s428 + $0x10] sm:$0xff]
        %v432 = vld [vmem:[%s428 + $0x18] sm:$0xff]
        %s433 = scalar_lea.vmem %s4, 32
        %v434 = vld [vmem:[%s433] sm:$0xff]
        %v435 = vld [vmem:[%s433 + $0x8] sm:$0xff]
        %v436 = vld [vmem:[%s433 + $0x10] sm:$0xff]
        %v437 = vld [vmem:[%s433 + $0x18] sm:$0xff]
        %s438 = scalar_lea.vmem %s1, 32
        %v439 = vld [vmem:[%s438] sm:$0xff]
        %v440 = vld [vmem:[%s438 + $0x8] sm:$0xff]
        %v441 = vld [vmem:[%s438 + $0x10] sm:$0xff]
        %v442 = vld [vmem:[%s438 + $0x18] sm:$0xff]
        %444 = vset.pattern.permute.xlu0 0
        %445 = vperm.xlu0 %444, %v429
        %v446 = vpop.permute.xlu0 %445
        %449 = vset.pattern.permute.xlu0 0
        %450 = vperm.xlu0 %449, %v430
        %v451 = vpop.permute.xlu0 %450
        %454 = vset.pattern.permute.xlu0 0
        %455 = vperm.xlu0 %454, %v431
        %v456 = vpop.permute.xlu0 %455
        %459 = vset.pattern.permute.xlu0 0
        %460 = vperm.xlu0 %459, %v432
        %v461 = vpop.permute.xlu0 %460
        %v464 = vsel %vm306, %v439, 0
        %v467 = vsel %vm306, %v440, 0
        %v470 = vsel %vm306, %v441, 0
        %v473 = vsel %vm306, %v442, 0
        %475 = vmatpush.msra.mxu0 0.0
        %476 = vmatpush.msra.mxu0 0.0
        %477 = vmatpush.msra.mxu0 0.0
        %478 = vmatpush.msra.mxu0 0.0
        %479 = vmatpush.msra.mxu0 0.0
        %480 = vmatpush.msra.mxu0 0.0
        %481 = vmatpush.msra.mxu0 0.0
        %482 = vmatpush.msra.mxu0 0.0
        %483 = vmatpush.msra.mxu0 0.0
        %484 = vmatpush.msra.mxu0 0.0
        %485 = vmatpush.msra.mxu0 0.0
        %486 = vmatpush.msra.mxu0 0.0
        %487 = vmatpush.msra.mxu0 0.0
        %488 = vmatpush.msra.mxu0 0.0
        %489 = vmatpush.msra.mxu0 %v427
        %490 = vmatpush.msra.mxu0 %v426
        %491 = vmatmul.f32.gmra.mxu0 %v464
        %v492 = vpop.f32.mrf.mxu0
        %v493 = vadd.f32 %v446, %v492
        %494 = vmatmul.f32.gmra.mxu0 %v467
        %v495 = vpop.f32.mrf.mxu0
        %v496 = vadd.f32 %v451, %v495
        %497 = vmatmul.f32.gmra.mxu0 %v470
        %v498 = vpop.f32.mrf.mxu0
        %v499 = vadd.f32 %v456, %v498
        %500 = vmatmul.f32.gmra.mxu0 %v473
        %v501 = vpop.f32.mrf.mxu0
        %v502 = vadd.f32 %v461, %v501
        %503 = vdwg.mxu0
        %v504 = vtanh.pop %v493
        %v505 = vtanh.pop %v496
        %v506 = vtanh.pop %v499
        %v507 = vtanh.pop %v502
        %s508 = scalar_lea.vmem %s3, 32
        %v509 = vld [vmem:[%s508] sm:$0xff]
        %v510 = vld [vmem:[%s508 + $0x8] sm:$0xff]
        %v511 = vld [vmem:[%s508 + $0x10] sm:$0xff]
        %v512 = vld [vmem:[%s508 + $0x18] sm:$0xff]
        %514 = vset.pattern.permute.xlu0 0
        %515 = vperm.xlu0 %514, %v434
        %v516 = vpop.permute.xlu0 %515
        %519 = vset.pattern.permute.xlu0 0
        %520 = vperm.xlu0 %519, %v435
        %v521 = vpop.permute.xlu0 %520
        %524 = vset.pattern.permute.xlu0 0
        %525 = vperm.xlu0 %524, %v436
        %v526 = vpop.permute.xlu0 %525
        %529 = vset.pattern.permute.xlu0 0
        %530 = vperm.xlu0 %529, %v437
        %v531 = vpop.permute.xlu0 %530
        %v534 = vsel %vm376, %v509, 0
        %v537 = vsel %vm376, %v510, 0
        %v540 = vsel %vm376, %v511, 0
        %v543 = vsel %vm376, %v512, 0
        %545 = vmatpush.msra.mxu0 0.0
        %546 = vmatpush.msra.mxu0 0.0
        %547 = vmatpush.msra.mxu0 0.0
        %548 = vmatpush.msra.mxu0 0.0
        %549 = vmatpush.msra.mxu0 0.0
        %550 = vmatpush.msra.mxu0 0.0
        %551 = vmatpush.msra.mxu0 0.0
        %552 = vmatpush.msra.mxu0 0.0
        %553 = vmatpush.msra.mxu0 0.0
        %554 = vmatpush.msra.mxu0 0.0
        %555 = vmatpush.msra.mxu0 0.0
        %556 = vmatpush.msra.mxu0 0.0
        %557 = vmatpush.msra.mxu0 %v507
        %558 = vmatpush.msra.mxu0 %v506
        %559 = vmatpush.msra.mxu0 %v505
        %560 = vmatpush.msra.mxu0 %v504
        %561 = vmatmul.f32.gmra.mxu0 %v534
        %v562 = vpop.f32.mrf.mxu0
        %v563 = vadd.f32 %v516, %v562
        %564 = vmatmul.f32.gmra.mxu0 %v537
        %v565 = vpop.f32.mrf.mxu0
        %v566 = vadd.f32 %v521, %v565
        %567 = vmatmul.f32.gmra.mxu0 %v540
        %v568 = vpop.f32.mrf.mxu0
        %v569 = vadd.f32 %v526, %v568
        %570 = vmatmul.f32.gmra.mxu0 %v543
        %v571 = vpop.f32.mrf.mxu0
        %v572 = vadd.f32 %v531, %v571
        %573 = vdwg.mxu0
        %v574 = vtanh.pop %v563
        %v575 = vtanh.pop %v566
        %v576 = vmul.f32 %v574, 1.442695
        %v577 = vpow.pop %v576
        %v578 = vmul.f32 %v575, 1.442695
        %v579 = vpow.pop %v578
        %v580 = vmul.f32 %v270, %v577
        %v581 = vmul.f32 %v271, %v579
        %v582 = vadd.f32 %v580, %v569
        %v583 = vadd.f32 %v581, %v572
        %s584 = scalar_lea.vmem %s2, 64
        %v585 = vld [vmem:[%s584] sm:$0xff]
        %v586 = vld [vmem:[%s584 + $0x8] sm:$0xff]
        %v587 = vld [vmem:[%s584 + $0x10] sm:$0xff]
        %v588 = vld [vmem:[%s584 + $0x18] sm:$0xff]
        %s589 = scalar_lea.vmem %s4, 64
        %v590 = vld [vmem:[%s589] sm:$0xff]
        %v591 = vld [vmem:[%s589 + $0x8] sm:$0xff]
        %v592 = vld [vmem:[%s589 + $0x10] sm:$0xff]
        %v593 = vld [vmem:[%s589 + $0x18] sm:$0xff]
        %s594 = scalar_lea.vmem %s1, 64
        %v595 = vld [vmem:[%s594] sm:$0xff]
        %v596 = vld [vmem:[%s594 + $0x8] sm:$0xff]
        %v597 = vld [vmem:[%s594 + $0x10] sm:$0xff]
        %v598 = vld [vmem:[%s594 + $0x18] sm:$0xff]
        %600 = vset.pattern.permute.xlu0 0
        %601 = vperm.xlu0 %600, %v585
        %v602 = vpop.permute.xlu0 %601
        %605 = vset.pattern.permute.xlu0 0
        %606 = vperm.xlu0 %605, %v586
        %v607 = vpop.permute.xlu0 %606
        %610 = vset.pattern.permute.xlu0 0
        %611 = vperm.xlu0 %610, %v587
        %v612 = vpop.permute.xlu0 %611
        %615 = vset.pattern.permute.xlu0 0
        %616 = vperm.xlu0 %615, %v588
        %v617 = vpop.permute.xlu0 %616
        %v620 = vsel %vm306, %v595, 0
        %v623 = vsel %vm306, %v596, 0
        %v626 = vsel %vm306, %v597, 0
        %v629 = vsel %vm306, %v598, 0
        %631 = vmatpush.msra.mxu0 0.0
        %632 = vmatpush.msra.mxu0 0.0
        %633 = vmatpush.msra.mxu0 0.0
        %634 = vmatpush.msra.mxu0 0.0
        %635 = vmatpush.msra.mxu0 0.0
        %636 = vmatpush.msra.mxu0 0.0
        %637 = vmatpush.msra.mxu0 0.0
        %638 = vmatpush.msra.mxu0 0.0
        %639 = vmatpush.msra.mxu0 0.0
        %640 = vmatpush.msra.mxu0 0.0
        %641 = vmatpush.msra.mxu0 0.0
        %642 = vmatpush.msra.mxu0 0.0
        %643 = vmatpush.msra.mxu0 0.0
        %644 = vmatpush.msra.mxu0 0.0
        %645 = vmatpush.msra.mxu0 %v583
        %646 = vmatpush.msra.mxu0 %v582
        %647 = vmatmul.f32.gmra.mxu0 %v620
        %v648 = vpop.f32.mrf.mxu0
        %v649 = vadd.f32 %v602, %v648
        %650 = vmatmul.f32.gmra.mxu0 %v623
        %v651 = vpop.f32.mrf.mxu0
        %v652 = vadd.f32 %v607, %v651
        %653 = vmatmul.f32.gmra.mxu0 %v626
        %v654 = vpop.f32.mrf.mxu0
        %v655 = vadd.f32 %v612, %v654
        %656 = vmatmul.f32.gmra.mxu0 %v629
        %v657 = vpop.f32.mrf.mxu0
        %v658 = vadd.f32 %v617, %v657
        %659 = vdwg.mxu0
        %v660 = vtanh.pop %v649
        %v661 = vtanh.pop %v652
        %v662 = vtanh.pop %v655
        %v663 = vtanh.pop %v658
        %s664 = scalar_lea.vmem %s3, 64
        %v665 = vld [vmem:[%s664] sm:$0xff]
        %v666 = vld [vmem:[%s664 + $0x8] sm:$0xff]
        %v667 = vld [vmem:[%s664 + $0x10] sm:$0xff]
        %v668 = vld [vmem:[%s664 + $0x18] sm:$0xff]
        %670 = vset.pattern.permute.xlu0 0
        %671 = vperm.xlu0 %670, %v590
        %v672 = vpop.permute.xlu0 %671
        %675 = vset.pattern.permute.xlu0 0
        %676 = vperm.xlu0 %675, %v591
        %v677 = vpop.permute.xlu0 %676
        %680 = vset.pattern.permute.xlu0 0
        %681 = vperm.xlu0 %680, %v592
        %v682 = vpop.permute.xlu0 %681
        %685 = vset.pattern.permute.xlu0 0
        %686 = vperm.xlu0 %685, %v593
        %v687 = vpop.permute.xlu0 %686
        %v690 = vsel %vm376, %v665, 0
        %v693 = vsel %vm376, %v666, 0
        %v696 = vsel %vm376, %v667, 0
        %v699 = vsel %vm376, %v668, 0
        %701 = vmatpush.msra.mxu0 0.0
        %702 = vmatpush.msra.mxu0 0.0
        %703 = vmatpush.msra.mxu0 0.0
        %704 = vmatpush.msra.mxu0 0.0
        %705 = vmatpush.msra.mxu0 0.0
        %706 = vmatpush.msra.mxu0 0.0
        %707 = vmatpush.msra.mxu0 0.0
        %708 = vmatpush.msra.mxu0 0.0
        %709 = vmatpush.msra.mxu0 0.0
        %710 = vmatpush.msra.mxu0 0.0
        %711 = vmatpush.msra.mxu0 0.0
        %712 = vmatpush.msra.mxu0 0.0
        %713 = vmatpush.msra.mxu0 %v663
        %714 = vmatpush.msra.mxu0 %v662
        %715 = vmatpush.msra.mxu0 %v661
        %716 = vmatpush.msra.mxu0 %v660
        %717 = vmatmul.f32.gmra.mxu0 %v690
        %v718 = vpop.f32.mrf.mxu0
        %v719 = vadd.f32 %v672, %v718
        %720 = vmatmul.f32.gmra.mxu0 %v693
        %v721 = vpop.f32.mrf.mxu0
        %v722 = vadd.f32 %v677, %v721
        %723 = vmatmul.f32.gmra.mxu0 %v696
        %v724 = vpop.f32.mrf.mxu0
        %v725 = vadd.f32 %v682, %v724
        %726 = vmatmul.f32.gmra.mxu0 %v699
        %v727 = vpop.f32.mrf.mxu0
        %v728 = vadd.f32 %v687, %v727
        %729 = vdwg.mxu0
        %v730 = vtanh.pop %v719
        %v731 = vtanh.pop %v722
        %v732 = vmul.f32 %v730, 1.442695
        %v733 = vpow.pop %v732
        %v734 = vmul.f32 %v731, 1.442695
        %v735 = vpow.pop %v734
        %v736 = vmul.f32 %v426, %v733
        %v737 = vmul.f32 %v427, %v735
        %v738 = vadd.f32 %v736, %v725
        %v739 = vadd.f32 %v737, %v728
        %s740 = scalar_lea.vmem %s2, 96
        %v741 = vld [vmem:[%s740] sm:$0xff]
        %v742 = vld [vmem:[%s740 + $0x8] sm:$0xff]
        %v743 = vld [vmem:[%s740 + $0x10] sm:$0xff]
        %v744 = vld [vmem:[%s740 + $0x18] sm:$0xff]
        %s745 = scalar_lea.vmem %s4, 96
        %v746 = vld [vmem:[%s745] sm:$0xff]
        %v747 = vld [vmem:[%s745 + $0x8] sm:$0xff]
        %v748 = vld [vmem:[%s745 + $0x10] sm:$0xff]
        %v749 = vld [vmem:[%s745 + $0x18] sm:$0xff]
        %s750 = scalar_lea.vmem %s1, 96
        %v751 = vld [vmem:[%s750] sm:$0xff]
        %v752 = vld [vmem:[%s750 + $0x8] sm:$0xff]
        %v753 = vld [vmem:[%s750 + $0x10] sm:$0xff]
        %v754 = vld [vmem:[%s750 + $0x18] sm:$0xff]
        %756 = vset.pattern.permute.xlu0 0
        %757 = vperm.xlu0 %756, %v741
        %v758 = vpop.permute.xlu0 %757
        %761 = vset.pattern.permute.xlu0 0
        %762 = vperm.xlu0 %761, %v742
        %v763 = vpop.permute.xlu0 %762
        %766 = vset.pattern.permute.xlu0 0
        %767 = vperm.xlu0 %766, %v743
        %v768 = vpop.permute.xlu0 %767
        %771 = vset.pattern.permute.xlu0 0
        %772 = vperm.xlu0 %771, %v744
        %v773 = vpop.permute.xlu0 %772
        %v776 = vsel %vm306, %v751, 0
        %v779 = vsel %vm306, %v752, 0
        %v782 = vsel %vm306, %v753, 0
        %v785 = vsel %vm306, %v754, 0
        %787 = vmatpush.msra.mxu0 0.0
        %788 = vmatpush.msra.mxu0 0.0
        %789 = vmatpush.msra.mxu0 0.0
        %790 = vmatpush.msra.mxu0 0.0
        %791 = vmatpush.msra.mxu0 0.0
        %792 = vmatpush.msra.mxu0 0.0
        %793 = vmatpush.msra.mxu0 0.0
        %794 = vmatpush.msra.mxu0 0.0
        %795 = vmatpush.msra.mxu0 0.0
        %796 = vmatpush.msra.mxu0 0.0
        %797 = vmatpush.msra.mxu0 0.0
        %798 = vmatpush.msra.mxu0 0.0
        %799 = vmatpush.msra.mxu0 0.0
        %800 = vmatpush.msra.mxu0 0.0
        %801 = vmatpush.msra.mxu0 %v739
        %802 = vmatpush.msra.mxu0 %v738
        %803 = vmatmul.f32.gmra.mxu0 %v776
        %v804 = vpop.f32.mrf.mxu0
        %v805 = vadd.f32 %v758, %v804
        %806 = vmatmul.f32.gmra.mxu0 %v779
        %v807 = vpop.f32.mrf.mxu0
        %v808 = vadd.f32 %v763, %v807
        %809 = vmatmul.f32.gmra.mxu0 %v782
        %v810 = vpop.f32.mrf.mxu0
        %v811 = vadd.f32 %v768, %v810
        %812 = vmatmul.f32.gmra.mxu0 %v785
        %v813 = vpop.f32.mrf.mxu0
        %v814 = vadd.f32 %v773, %v813
        %815 = vdwg.mxu0
        %v816 = vtanh.pop %v805
        %v817 = vtanh.pop %v808
        %v818 = vtanh.pop %v811
        %v819 = vtanh.pop %v814
        %s820 = scalar_lea.vmem %s3, 96
        %v821 = vld [vmem:[%s820] sm:$0xff]
        %v822 = vld [vmem:[%s820 + $0x8] sm:$0xff]
        %v823 = vld [vmem:[%s820 + $0x10] sm:$0xff]
        %v824 = vld [vmem:[%s820 + $0x18] sm:$0xff]
        %826 = vset.pattern.permute.xlu0 0
        %827 = vperm.xlu0 %826, %v746
        %v828 = vpop.permute.xlu0 %827
        %831 = vset.pattern.permute.xlu0 0
        %832 = vperm.xlu0 %831, %v747
        %v833 = vpop.permute.xlu0 %832
        %836 = vset.pattern.permute.xlu0 0
        %837 = vperm.xlu0 %836, %v748
        %v838 = vpop.permute.xlu0 %837
        %841 = vset.pattern.permute.xlu0 0
        %842 = vperm.xlu0 %841, %v749
        %v843 = vpop.permute.xlu0 %842
        %v846 = vsel %vm376, %v821, 0
        %v849 = vsel %vm376, %v822, 0
        %v852 = vsel %vm376, %v823, 0
        %v855 = vsel %vm376, %v824, 0
        %857 = vmatpush.msra.mxu0 0.0
        %858 = vmatpush.msra.mxu0 0.0
        %859 = vmatpush.msra.mxu0 0.0
        %860 = vmatpush.msra.mxu0 0.0
        %861 = vmatpush.msra.mxu0 0.0
        %862 = vmatpush.msra.mxu0 0.0
        %863 = vmatpush.msra.mxu0 0.0
        %864 = vmatpush.msra.mxu0 0.0
        %865 = vmatpush.msra.mxu0 0.0
        %866 = vmatpush.msra.mxu0 0.0
        %867 = vmatpush.msra.mxu0 0.0
        %868 = vmatpush.msra.mxu0 0.0
        %869 = vmatpush.msra.mxu0 %v819
        %870 = vmatpush.msra.mxu0 %v818
        %871 = vmatpush.msra.mxu0 %v817
        %872 = vmatpush.msra.mxu0 %v816
        %873 = vmatmul.f32.gmra.mxu0 %v846
        %v874 = vpop.f32.mrf.mxu0
        %v875 = vadd.f32 %v828, %v874
        %876 = vmatmul.f32.gmra.mxu0 %v849
        %v877 = vpop.f32.mrf.mxu0
        %v878 = vadd.f32 %v833, %v877
        %879 = vmatmul.f32.gmra.mxu0 %v852
        %v880 = vpop.f32.mrf.mxu0
        %v881 = vadd.f32 %v838, %v880
        %882 = vmatmul.f32.gmra.mxu0 %v855
        %v883 = vpop.f32.mrf.mxu0
        %v884 = vadd.f32 %v843, %v883
        %885 = vdwg.mxu0
        %v886 = vtanh.pop %v875
        %v887 = vtanh.pop %v878
        %v888 = vmul.f32 %v886, 1.442695
        %v889 = vpow.pop %v888
        %v890 = vmul.f32 %v887, 1.442695
        %v891 = vpow.pop %v890
        %v892 = vmul.f32 %v582, %v889
        %v893 = vmul.f32 %v583, %v891
        %v894 = vadd.f32 %v892, %v881
        %v895 = vadd.f32 %v893, %v884
        %896 = vst [vmem:[%s269] sm:$0xff] %v894
        %897 = vst [vmem:[%s269 + $0x8] sm:$0xff] %v895
        %898 = vst [vmem:[%s269 + $0x10] sm:$0xff] %v738
        %899 = vst [vmem:[%s269 + $0x18] sm:$0xff] %v739
        %s900 = sand.u32 %s137, 1
        %s901 = scalar_lea.sflag [#allocation4], %s900
        %s902 = sand.u32 %s137, 1
        %s903 = smul.addr %s902, 32
        %s904 = scalar_lea.vmem [#allocation3], %s903
        // Predicated region
        $region79: #{tpu_custom_call.1} parent=73 // pred_check
          %p905 = pneg %p147
        $region80: #{tpu_custom_call.1} parent=73 // pred_check_branch
          %907 = sbr.rel (%p905) target = $region82
        $region81: #{tpu_custom_call.1} parent=73 // pred_region
          %909 = vsyncadd %s901, 0
          %s910 = smul.addr %s19, 8
          %s911 = scalar_lea.hbm %s5, %s910
          %s912 = sshll.u32 %s904, 4
          %s913 = int_to_ptr.vmem [resolvable:$true] %s912
          %s914 = sshll.u32 %s911, 4
          %s915 = int_to_ptr.hbm [resolvable:$true] %s914
          %920 = dma.vmem_to_hbm [thread:$0]  %s913, 512, %s915, %s901, 128, 256, 8
        $region82: #{tpu_custom_call.1} parent=73 // pred_fallthru
          _
      $region74: #{tpu_custom_call.1} parent=5 // pred_fallthru
        _
      %p921 = scmp.le.s32.totalorder 2, %s14
      // Predicated region
      $region83: #{tpu_custom_call.1} parent=5 // pred_check
        %p922 = pneg %p921
      $region84: #{tpu_custom_call.1} parent=5 // pred_check_branch
        %924 = sbr.rel (%p922) target = $region86
      $region85: #{tpu_custom_call.1} parent=5 // pred_region
        %s925 = ssub.s32 %s14, 2
        // Predicated region
        $region87: #{tpu_custom_call.1} parent=85 // pred_check
          %p926 = pneg %p153
        $region88: #{tpu_custom_call.1} parent=85 // pred_check_branch
          %928 = sbr.rel (%p926) target = $region90
        $region89: #{tpu_custom_call.1} parent=85 // pred_region
          %s929 = sand.u32 %s138, 1
          %s930 = scalar_lea.sflag [#allocation4], %s929
          %s931 = sand.u32 %s138, 1
          %s932 = smul.addr %s931, 32
          %s933 = scalar_lea.vmem [#allocation3], %s932
          %935 = dma.done %s930, 512
        $region90: #{tpu_custom_call.1} parent=85 // pred_fallthru
          _
      $region86: #{tpu_custom_call.1} parent=5 // pred_fallthru
        _
    $region6: #{tpu_custom_call.1} parent=1 // loop_footer
      %s18 = sadd.s32 1, %s14
    $region7: #{tpu_custom_call.1} parent=1 // loop_footer_branch
      %13 = sbr.rel target = $region3
    $region8: #{tpu_custom_call.1} parent=1 // loop_exit
      _
    %936 = vsyncpa [#allocation4], 1
    %s937 = scalar_lea.sflag [#allocation4], 1
    %938 = vsyncpa %s937, 1

</llo_original>
